<compile_context>
chip_gen: v7x
topology: tpu7x:2x2x1
jax: 0.10.0
libtpu: 0.0.40
codegen_flags: <defaults>
</compile_context>

<pallas_src>
import jax
import jax.numpy as jnp
from jax.experimental import pallas as pl
from jax.experimental.pallas import tpu as pltpu


# ---------------------------------------------------------------------------
# Sizing helpers.
# ---------------------------------------------------------------------------
def _vmem_cap_bytes(default=48 << 20):
    """Per-core VMEM ceiling with headroom (v7x has only 64 MiB per TC)."""
    try:
        return int(pltpu.get_tpu_info().vmem_capacity_bytes * 3 // 4)
    except Exception:
        return default


def _choose_batch_tile(B, D, itemsize, *, target_step_bytes=4 << 20,
                       vmem_budget_bytes=40 << 20, min_grid_steps=4,
                       extra_row_bytes=0):
    """Pick a batch tile that is HBM-roofline sized but fits VMEM.

    target_step_bytes ~4 MiB of x per grid step hides the ~0.35us fixed
    per-step overhead on every generation (v7x's faster HBM needs the larger
    tile; v5e is already >=85% roofline well below it).
    """
    hbm_row = D * itemsize                        # x HBM bytes per batch row
    vmem_row = 2 * hbm_row + extra_row_bytes      # dbl-buffered x + temps/out
    tb = max(128, target_step_bytes // hbm_row)
    tb = min(tb, max(128, vmem_budget_bytes // vmem_row))
    if B >= min_grid_steps * 128:
        tb = min(tb, B // min_grid_steps)         # >= 2 steps per v7x TensorCore
    tb = min(tb, pl.cdiv(B, 128) * 128)           # never tile past the padded batch
    return max(128, (int(tb) // 128) * 128)


# ---------------------------------------------------------------------------
# Primary (inference) path: whole model folded to a single GEMV.
# ---------------------------------------------------------------------------
def _gemv_kernel_f32(x_ref, w_ref, b_ref, o_ref):
    # f32 operands: exact VPU multiply + XLU lane reduction (keeps full f32
    # numerics; DEFAULT MXU matmul precision would truncate f32 operands).
    # x_ref: [tb, D] f32, w_ref: [1, D] f32, b_ref: [1, 1] f32.
    y = jnp.sum(x_ref[...] * w_ref[...], axis=-1, keepdims=True)
    o_ref[...] = (y + b_ref[...]).astype(o_ref.dtype)


def _gemv_kernel_mxu(x_ref, w_ref, b_ref, o_ref):
    # bf16 operands: native MXU bf16 x bf16 -> f32 accumulation.  No full-tile
    # VPU up-cast (no f32 temporary / extra vreg pressure, and no bf16 VPU
    # dependence on v5e) and the reduction rides the otherwise-idle MXU.
    # x_ref: [tb, D] bf16, w_ref: [D, 1] bf16, b_ref: [1, 1] f32.
    y = jnp.dot(x_ref[...], w_ref[...], preferred_element_type=jnp.float32)
    o_ref[...] = (y + b_ref[...]).astype(o_ref.dtype)


def fold_params(params):
    """Collapse the 5 Linear layers into one affine map (valid in eval mode).

    Call ONCE at parameter-load time and reuse the result: this hoists 5 small
    XLA matmuls + casts out of the per-call path and makes the folding rounding
    deterministic per deployment.  Returns {"w_col": [D,1] f32, "b": [1,1] f32}.
    """
    w = params["w1"]
    b = params["b1"]
    for i in (2, 3, 4, 5):
        w = w @ params[f"w{i}"]
        b = b @ params[f"w{i}"] + params[f"b{i}"]
    return {"w_col": w, "b": b}


def aesthetic_predictor(x, folded, *, target_step_bytes=4 << 20):
    """Folded single-GEMV inference path.

    x: [B, D], f32 or bf16.  The kernel computes in x's dtype -- there is NO
    wrapper-side cast of x (a standalone cast would add a full extra HBM pass
    and invert the bf16 traffic saving; cast upstream in the embedding producer
    instead).  Ragged batches are padded to the tile and sliced back.
    """
    B, D = x.shape
    itemsize = jnp.dtype(x.dtype).itemsize
    tb = _choose_batch_tile(B, D, itemsize,
                            target_step_bytes=target_step_bytes,
                            extra_row_bytes=D * 4 + 4)  # f32 temp / out per row

    # Ragged batch -> pad to a tile multiple (single extra XLA pad only when
    # B % tb != 0), slice the result back below.
    B_pad = pl.cdiv(B, tb) * tb
    x_p = jnp.pad(x, ((0, B_pad - B), (0, 0))) if B_pad != B else x

    bias = folded["b"].astype(jnp.float32)                 # [1, 1]
    if x.dtype == jnp.float32:
        kernel = _gemv_kernel_f32
        w_op = folded["w_col"].reshape(1, D)               # [1, D] row for VPU
        w_spec = pl.BlockSpec((1, D), lambda i: (0, 0))
    else:
        kernel = _gemv_kernel_mxu
        w_op = folded["w_col"].astype(x.dtype)             # [D, 1] col for MXU
        w_spec = pl.BlockSpec((D, 1), lambda i: (0, 0))

    # VMEM budget: double-buffered x tile dominates; weight/bias blocks are a
    # few KiB so default double-buffering of them is immaterial.
    vmem_needed = (2 * tb * D * itemsize       # x tile, double-buffered
                   + tb * D * 4                # in-kernel temp (f32 VPU path)
                   + 2 * (D * 4 + 4)           # weight + bias blocks
                   + 2 * tb * 4)               # output tile, double-buffered
    vmem_limit = int(min(max(4 * vmem_needed, 16 << 20), _vmem_cap_bytes()))

    grid_spec = pltpu.PrefetchScalarGridSpec(
        num_scalar_prefetch=0,
        grid=(B_pad // tb,),
        in_specs=[
            pl.BlockSpec((tb, D), lambda i: (i, 0)),   # x tile (the real roofline)
            w_spec,                                    # folded weight
            pl.BlockSpec((1, 1), lambda i: (0, 0)),    # folded bias
        ],
        out_specs=pl.BlockSpec((tb, 1), lambda i: (i, 0)),
    )

    out = pl.pallas_call(
        kernel,
        out_shape=jax.ShapeDtypeStruct((B_pad, 1), jnp.float32),
        grid_spec=grid_spec,
        compiler_params=pltpu.CompilerParams(
            dimension_semantics=("parallel",),
            vmem_limit_bytes=vmem_limit),
    )(x_p, w_op, bias)
    return out[:B] if B_pad != B else out


# ---------------------------------------------------------------------------
# Secondary path: keeps the layer structure (basis for a future dropout-train
# kernel).  Layers 4 and 5 have no dropout between them, so they are pre-folded
# to a single [64, 1] column even for training -- this removes the worst MXU
# shapes (N=16 and N=1) and two lane-sparse intermediates.
# ---------------------------------------------------------------------------
def _layered_kernel(x_ref, w1_ref, b1_ref, w2_ref, b2_ref, w3_ref, b3_ref,
                    w45_ref, b45_ref, o_ref):
    h = x_ref[...].astype(jnp.float32)
    h = jnp.dot(h, w1_ref[...], preferred_element_type=jnp.float32) + b1_ref[...]
    # TODO(synk): training-mode Dropout(0.2) mask would go here.
    h = jnp.dot(h, w2_ref[...], preferred_element_type=jnp.float32) + b2_ref[...]
    # TODO(synk): training-mode Dropout(0.2) mask would go here.
    h = jnp.dot(h, w3_ref[...], preferred_element_type=jnp.float32) + b3_ref[...]
    # TODO(synk): training-mode Dropout(0.1) mask would go here.
    y = jnp.dot(h, w45_ref[...], preferred_element_type=jnp.float32) + b45_ref[...]
    o_ref[...] = y.astype(o_ref.dtype)


def aesthetic_predictor_layered(x, params, *, target_step_bytes=4 << 20,
                                single_buffer_weights=True):
    """5-layer (last two pre-folded) fused kernel with explicit VMEM sizing."""
    B, D = x.shape
    H1, H2, H3 = 1024, 128, 64
    itemsize = jnp.dtype(x.dtype).itemsize

    # Pre-fold layers 4 & 5 (no dropout between them in the original module).
    w45 = params["w4"] @ params["w5"]                       # [64, 1]
    b45 = params["b4"] @ params["w5"] + params["b5"]        # [1, 1]

    consts = [params["w1"], params["b1"], params["w2"], params["b2"],
              params["w3"], params["b3"], w45, b45]
    weight_bytes = sum(int(a.size) * 4 for a in consts)
    weight_buf = 1 if single_buffer_weights else 2

    # Per-row VMEM beyond the double-buffered x tile: f32 x copy + h1/h2/h3 + out.
    extra_row = (D + H1 + H2 + H3 + 1) * 4
    budget = _vmem_cap_bytes() - weight_buf * weight_bytes - (4 << 20)
    tb = _choose_batch_tile(B, D, itemsize,
                            target_step_bytes=target_step_bytes,
                            vmem_budget_bytes=max(budget, 8 << 20),
                            extra_row_bytes=extra_row)

    B_pad = pl.cdiv(B, tb) * tb
    x_p = jnp.pad(x, ((0, B_pad - B), (0, 0))) if B_pad != B else x

    vmem_needed = (2 * tb * D * itemsize
                   + weight_buf * weight_bytes
                   + tb * (D + H1 + H2 + H3) * 4   # f32 copy + intermediates
                   + 2 * tb * 4)
    vmem_limit = int(min(max(4 * vmem_needed, 16 << 20), _vmem_cap_bytes()))

    def resident(arr):
        # Whole array in VMEM, same block every grid step; single-buffered so
        # constant weights do not pay double-buffer VMEM.
        if single_buffer_weights:
            return pl.BlockSpec(arr.shape, lambda i: (0,) * arr.ndim,
                                pipeline_mode=pl.Buffered(1))
        return pl.BlockSpec(arr.shape, lambda i: (0,) * arr.ndim)

    in_specs = [pl.BlockSpec((tb, D), lambda i: (i, 0))]
    in_specs += [resident(a) for a in consts]

    grid_spec = pltpu.PrefetchScalarGridSpec(
        num_scalar_prefetch=0,
        grid=(B_pad // tb,),
        in_specs=in_specs,
        out_specs=pl.BlockSpec((tb, 1), lambda i: (i, 0)),
    )

    out = pl.pallas_call(
        _layered_kernel,
        out_shape=jax.ShapeDtypeStruct((B_pad, 1), jnp.float32),
        grid_spec=grid_spec,
        compiler_params=pltpu.CompilerParams(
            dimension_semantics=("parallel",),
            vmem_limit_bytes=vmem_limit),
    )(x_p, *consts)
    return out[:B] if B_pad != B else out


# ---------------------------------------------------------------------------
# Deterministic synthetic params + pure-JAX reference.
# ---------------------------------------------------------------------------
def init_params(key, input_size):
    """Weights stored as [in, out] (= torch weight.T), biases [1, out]."""
    dims = [input_size, 1024, 128, 64, 16, 1]
    params = {}
    for li in range(5):
        key, kw, kb = jax.random.split(key, 3)
        fan_in, fan_out = dims[li], dims[li + 1]
        scale = 1.0 / jnp.sqrt(jnp.float32(fan_in))
        params[f"w{li + 1}"] = (
            jax.random.uniform(kw, (fan_in, fan_out), jnp.float32, -1.0, 1.0) * scale)
        params[f"b{li + 1}"] = (
            jax.random.uniform(kb, (1, fan_out), jnp.float32, -1.0, 1.0) * scale)
    return params


def reference(x, p):
    h = x @ p["w1"] + p["b1"]
    h = h @ p["w2"] + p["b2"]
    h = h @ p["w3"] + p["b3"]
    h = h @ p["w4"] + p["b4"]
    h = h @ p["w5"] + p["b5"]
    return h


if __name__ == "__main__":
    key = jax.random.PRNGKey(0)
    # D=256 embedding, B=1024: x is 1 MiB, the tile chooser yields tb=256 ->
    # 4 grid steps, so both v7x TensorCores get >= 2 steps and pipeline.  For
    # production batches the chooser grows tb toward ~4 MiB of x per step.
    B, INPUT_SIZE = 1024, 256

    kx, kp = jax.random.split(key)
    x = jax.random.normal(kx, (B, INPUT_SIZE), jnp.float32)
    params = init_params(kp, INPUT_SIZE)
    ref = reference(x, params)

    # Fold ONCE at parameter-load time (hoisted out of the per-call path).
    folded = fold_params(params)

    # Primary path, f32 inputs (exact VPU contraction).
    out = jax.block_until_ready(aesthetic_predictor(x, folded))
    assert out.shape == (B, 1), out.shape
    assert jnp.allclose(out, ref, atol=5e-4, rtol=5e-3), "folded f32 mismatch"

    # bf16 path: x arrives ALREADY bf16 from the upstream producer (no extra
    # wrapper-side cast pass); native MXU bf16 x bf16 -> f32 in-kernel.
    x_bf16 = x.astype(jnp.bfloat16)   # stands in for an upstream bf16 producer
    out_bf16 = jax.block_until_ready(aesthetic_predictor(x_bf16, folded))
    assert out_bf16.shape == (B, 1), out_bf16.shape
    assert jnp.allclose(out_bf16, ref, atol=2e-2, rtol=5e-2), "folded bf16 mismatch"

    # Ragged batch: exercises the pad-and-slice path (no divisibility asserts).
    B_r = 100
    out_r = jax.block_until_ready(aesthetic_predictor(x[:B_r], folded))
    assert out_r.shape == (B_r, 1), out_r.shape
    assert jnp.allclose(out_r, ref[:B_r], atol=5e-4, rtol=5e-3), "ragged mismatch"

    # Layered path (secondary; basis for a future training-mode dropout kernel).
    # Single-buffered constant weights requested via pipeline_mode=pl.Buffered(1);
    # fall back to default buffering if this Pallas build rejects it.
    try:
        out_layered = aesthetic_predictor_layered(x, params,
                                                  single_buffer_weights=True)
        out_layered = jax.block_until_ready(out_layered)
    except Exception:
        out_layered = aesthetic_predictor_layered(x, params,
                                                  single_buffer_weights=False)
        out_layered = jax.block_until_ready(out_layered)
    assert out_layered.shape == (B, 1), out_layered.shape
    assert jnp.allclose(out_layered, ref, atol=5e-4, rtol=5e-3), "layered mismatch"

    print("KERNEL_OK")
</pallas_src>

<mosaic_0001>
module attributes {stable_mosaic.version = 11 : i64} {
  func.func @_gemv_kernel_f32(%arg0: i32, %arg1: memref<256x256xf32, #tpu.memory_space<vmem>>, %arg2: memref<1x256xf32, #tpu.memory_space<vmem>>, %arg3: memref<1x1xf32, #tpu.memory_space<vmem>>, %arg4: memref<256x1xf32, #tpu.memory_space<vmem>>) attributes {dimension_semantics = [#tpu.dimension_semantics<parallel>], iteration_bounds = array<i64: 4>, scalar_prefetch = 0 : i64, scratch_operands = 0 : i64, tpu.core_type = #tpu.core_type<tc>, window_params = [{transform_indices = @transform_0, window_bounds = array<i64: 256, 256>}, {pipeline_mode = #tpu.pipeline_mode<synchronous>, transform_indices = @transform_1, window_bounds = array<i64: 1, 256>}, {pipeline_mode = #tpu.pipeline_mode<synchronous>, transform_indices = @transform_2, window_bounds = array<i64: 1, 1>}, {transform_indices = @transform_3, window_bounds = array<i64: 256, 1>}]} {
    %c0 = arith.constant 0 : index
    %c0_0 = arith.constant 0 : index
    %0 = vector.load %arg1[%c0, %c0_0] : memref<256x256xf32, #tpu.memory_space<vmem>>, vector<256x256xf32>
    %c0_1 = arith.constant 0 : index
    %c0_2 = arith.constant 0 : index
    %1 = vector.load %arg2[%c0_1, %c0_2] : memref<1x256xf32, #tpu.memory_space<vmem>>, vector<1x256xf32>
    %2 = vector.broadcast %1 : vector<1x256xf32> to vector<256x256xf32>
    %3 = arith.mulf %0, %2 : vector<256x256xf32>
    %cst = arith.constant dense<0.000000e+00> : vector<256xf32>
    %4 = vector.multi_reduction <add>, %3, %cst [1] : vector<256x256xf32> to vector<256xf32>
    %5 = vector.shape_cast %4 : vector<256xf32> to vector<256x1xf32>
    %c0_3 = arith.constant 0 : index
    %c0_4 = arith.constant 0 : index
    %6 = vector.load %arg3[%c0_3, %c0_4] : memref<1x1xf32, #tpu.memory_space<vmem>>, vector<1x1xf32>
    %7 = vector.broadcast %6 : vector<1x1xf32> to vector<256x1xf32>
    %8 = arith.addf %5, %7 : vector<256x1xf32>
    %c0_5 = arith.constant 0 : index
    %c0_6 = arith.constant 0 : index
    %9 = vector.load %arg4[%c0_5, %c0_6] : memref<256x1xf32, #tpu.memory_space<vmem>>, vector<256x1xf32>
    tpu.vector_store %arg4[%c0_5, %c0_6], %8 {strides = array<i32>} : memref<256x1xf32, #tpu.memory_space<vmem>>, vector<256x1xf32>,
    return
  }
  func.func @transform_0(%arg0: i32) -> (i32, i32) {
    %c0_i32 = arith.constant 0 : i32
    %c0_i32_0 = arith.constant 0 : i32
    return %arg0, %c0_i32 : i32, i32
  }
  func.func @transform_1(%arg0: i32) -> (i32, i32) {
    %c0_i32 = arith.constant 0 : i32
    %c0_i32_0 = arith.constant 0 : i32
    %c0_i32_1 = arith.constant 0 : i32
    return %c0_i32, %c0_i32_0 : i32, i32
  }
  func.func @transform_2(%arg0: i32) -> (i32, i32) {
    %c0_i32 = arith.constant 0 : i32
    %c0_i32_0 = arith.constant 0 : i32
    %c0_i32_1 = arith.constant 0 : i32
    return %c0_i32, %c0_i32_0 : i32, i32
  }
  func.func @transform_3(%arg0: i32) -> (i32, i32) {
    %c0_i32 = arith.constant 0 : i32
    %c0_i32_0 = arith.constant 0 : i32
    return %arg0, %c0_i32 : i32, i32
  }
}

</mosaic_0001>

<llo_original>
// kernel: tpu_custom_call.1
$region0: #{tpu_custom_call.1}
  #allocation0 [shape = 'u32[]', space=smem, size = 0x4, offset = 0x4, fixed_abs, tag = 'smem constant byte address 0x4 - core index']
  #allocation1 [shape = 'u32[144,128]{1,0:T(1,128)}', space=vmem, size = 0x12000, scoped, tag = 'internal scratch']
  #allocation2 [shape = 'f32[1,1]{1,0:T(1,128)S(1)}', space=vmem, size = 0x200, scoped, tag = 'scoped memory for tpu_custom_call.1']
  %s0 = inlined_call_operand.hbm [shape: f32[1024,256], index: 0, kind: input, shape index: {}]
  %s1 = inlined_call_operand.vmem [shape: f32[1,256], index: 1, kind: input, shape index: {}]
  %s2 = inlined_call_operand.<no memory space> [shape: f32[1,1], index: 2, kind: input, shape index: {}]
  %s3 = inlined_call_operand.vmem [shape: f32[1024,1], index: 3, kind: output, shape index: {}]
  %s4 = sld [smem:[#allocation0]]
  $region49: #{tpu_custom_call.1} parent=0
    _
  %s6 = ssub.s32 1, %s4
  %s7 = scalar_select 0, %s6, %s4
  %v8 = vstv %s2
  %9 = vst [vmem:[#allocation2] sm:$0x1] %v8
  $region1: #{tpu_custom_call.1} parent=0
    #allocation3 [shape = 'u8[524288]{0}', space=vmem, size = 0x80000, scoped, tag = 'input window, operand 0']
    #allocation4 [shape = 's32[2]{0}', space=sflag, size = 0x8, scoped, tag = 'scoped memory for tpu_custom_call.1']
    %10 = vsyncpa [#allocation4], 0
    %s11 = scalar_lea.sflag [#allocation4], 1
    %12 = vsyncpa %s11, 0
    loop: start=0, step=1, limit=6
    $region2: #{tpu_custom_call.1} parent=1 // loop_pre_header
      _
    $region3: #{tpu_custom_call.1} parent=1 // loop_header
      %s14 = sphi 0, %s18
      %p15 = scmp.ge.s32.totalorder %s14, 6
      %s24 = sphi 0, %s26
      %s27 = sphi 0, %s24
      %s28 = sphi 0, %s27
      %s44 = sphi 0, %s28
      %s48 = sphi 0, %s48
      %s50 = sphi 0, %s48
      %s51 = sphi 0, %s50
      %s65 = sphi 0, %s51
      %s69 = sphi 0, %s69
      %s71 = sphi 0, %s69
      %s72 = sphi 0, %s71
      %s86 = sphi 0, %s72
      %s92 = sphi 0, %s94
      %s95 = sphi 0, %s92
      %s96 = sphi 0, %s95
      %s112 = sphi 0, %s96
    $region4: #{tpu_custom_call.1} parent=1 // loop_header_branch
      %17 = sbr.rel (%p15) target = $region8
    $region5: #{tpu_custom_call.1} parent=1 // loop_body
      %s19 = ssub.s32 %s14, 1
      %s20 = ssub.s32 %s14, 2
      %s21 = sadd.s32 %s14, 1
      %s22 = ssub.s32 %s14, %s21
      %p23 = scmp.eq.s32.totalorder %s22, 0
      %s25 = sadd.s32 %s24, 1
      %s26 = scalar_select %p23, %s24, %s25
      %p29 = pneg %p23
      %p30 = scmp.eq.s32.totalorder %s14, 3
      %p31 = por %p29, %p30
      %p32 = scmp.ne.s32.totalorder %s24, %s27
      %p33 = scmp.eq.s32.totalorder %s14, 0
      %p34 = por %p32, %p33
      %p35 = scmp.ne.s32.totalorder %s24, %s27
      %p36 = scmp.eq.s32.totalorder %s19, 3
      %p37 = por %p35, %p36
      %p38 = scmp.ne.s32.totalorder %s27, %s28
      %p39 = scmp.eq.s32.totalorder %s19, 0
      %p40 = por %p38, %p39
      %p41 = scmp.ne.s32.totalorder %s27, %s28
      %p42 = scmp.eq.s32.totalorder %s20, 3
      %p43 = por %p41, %p42
      %p45 = scmp.ne.s32.totalorder %s28, %s44
      %p46 = scmp.eq.s32.totalorder %s20, 0
      %p47 = por %p45, %p46
      %s49 = sadd.s32 %s48, 1
      %p52 = scmp.eq.s32.totalorder %s14, 3
      %p53 = scmp.ne.s32.totalorder %s48, %s50
      %p54 = scmp.eq.s32.totalorder %s14, 0
      %p55 = por %p53, %p54
      %p56 = scmp.ne.s32.totalorder %s48, %s50
      %p57 = scmp.eq.s32.totalorder %s19, 3
      %p58 = por %p56, %p57
      %p59 = scmp.ne.s32.totalorder %s50, %s51
      %p60 = scmp.eq.s32.totalorder %s19, 0
      %p61 = por %p59, %p60
      %p62 = scmp.ne.s32.totalorder %s50, %s51
      %p63 = scmp.eq.s32.totalorder %s20, 3
      %p64 = por %p62, %p63
      %p66 = scmp.ne.s32.totalorder %s51, %s65
      %p67 = scmp.eq.s32.totalorder %s20, 0
      %p68 = por %p66, %p67
      %s70 = sadd.s32 %s69, 1
      %p73 = scmp.eq.s32.totalorder %s14, 3
      %p74 = scmp.ne.s32.totalorder %s69, %s71
      %p75 = scmp.eq.s32.totalorder %s14, 0
      %p76 = por %p74, %p75
      %p77 = scmp.ne.s32.totalorder %s69, %s71
      %p78 = scmp.eq.s32.totalorder %s19, 3
      %p79 = por %p77, %p78
      %p80 = scmp.ne.s32.totalorder %s71, %s72
      %p81 = scmp.eq.s32.totalorder %s19, 0
      %p82 = por %p80, %p81
      %p83 = scmp.ne.s32.totalorder %s71, %s72
      %p84 = scmp.eq.s32.totalorder %s20, 3
      %p85 = por %p83, %p84
      %p87 = scmp.ne.s32.totalorder %s72, %s86
      %p88 = scmp.eq.s32.totalorder %s20, 0
      %p89 = por %p87, %p88
      %s90 = ssub.s32 %s14, %s21
      %p91 = scmp.eq.s32.totalorder %s90, 0
      %s93 = sadd.s32 %s92, 1
      %s94 = scalar_select %p91, %s92, %s93
      %p97 = pneg %p91
      %p98 = scmp.eq.s32.totalorder %s14, 3
      %p99 = por %p97, %p98
      %p100 = scmp.ne.s32.totalorder %s92, %s95
      %p101 = scmp.eq.s32.totalorder %s14, 0
      %p102 = por %p100, %p101
      %p103 = scmp.ne.s32.totalorder %s92, %s95
      %p104 = scmp.eq.s32.totalorder %s19, 3
      %p105 = por %p103, %p104
      %p106 = scmp.ne.s32.totalorder %s95, %s96
      %p107 = scmp.eq.s32.totalorder %s19, 0
      %p108 = por %p106, %p107
      %p109 = scmp.ne.s32.totalorder %s95, %s96
      %p110 = scmp.eq.s32.totalorder %s20, 3
      %p111 = por %p109, %p110
      %p113 = scmp.ne.s32.totalorder %s96, %s112
      %p114 = scmp.eq.s32.totalorder %s20, 0
      %p115 = por %p113, %p114
      %p116 = scmp.le.s32.totalorder 1, %s14
      %p117 = scmp.lt.s32.totalorder %s14, 5
      %p118 = pnand %p116, %p117
      %p119 = pneg %p118
      // Predicated region
      $region9: #{tpu_custom_call.1} parent=5 // pred_check
        _
      $region10: #{tpu_custom_call.1} parent=5 // pred_check_branch
        %121 = sbr.rel (%p118) target = $region12
      $region11: #{tpu_custom_call.1} parent=5 // pred_region
        %s122 = ssub.s32 %s14, 1
        // Predicated region
        $region13: #{tpu_custom_call.1} parent=11 // pred_check
          %p123 = pneg %p61
        $region14: #{tpu_custom_call.1} parent=11 // pred_check_branch
          %125 = sbr.rel (%p123) target = $region16
        $region15: #{tpu_custom_call.1} parent=11 // pred_region
          _
        $region16: #{tpu_custom_call.1} parent=11 // pred_fallthru
          _
        // Predicated region
        $region17: #{tpu_custom_call.1} parent=11 // pred_check
          %p126 = pneg %p82
        $region18: #{tpu_custom_call.1} parent=11 // pred_check_branch
          %128 = sbr.rel (%p126) target = $region20
        $region19: #{tpu_custom_call.1} parent=11 // pred_region
          _
        $region20: #{tpu_custom_call.1} parent=11 // pred_fallthru
          _
      $region12: #{tpu_custom_call.1} parent=5 // pred_fallthru
        _
      %p129 = scmp.lt.s32.totalorder %s14, 4
      // Predicated region
      $region21: #{tpu_custom_call.1} parent=5 // pred_check
        %p130 = pneg %p129
      $region22: #{tpu_custom_call.1} parent=5 // pred_check_branch
        %132 = sbr.rel (%p130) target = $region24
      $region23: #{tpu_custom_call.1} parent=5 // pred_region
        // Predicated region
        $region25: #{tpu_custom_call.1} parent=23 // pred_check
          %p133 = pneg %p34
        $region26: #{tpu_custom_call.1} parent=23 // pred_check_branch
          %135 = sbr.rel (%p133) target = $region28
        $region27: #{tpu_custom_call.1} parent=23 // pred_region
          %s136 = sand.u32 %s24, 1
          %s137 = scalar_lea.sflag [#allocation4], %s136
          %s138 = sand.u32 %s24, 1
          %s139 = smul.addr %s138, 512
          %s140 = scalar_lea.vmem [#allocation3], %s139
          %s141 = smul.u32 32, %s14
          %s143 = ssub.s32 8192, 8192
          %144 = vsyncadd %s137, %s143
          %s145 = smul.addr %s141, 2
          %s146 = smul.addr %s145, 128
          %s147 = scalar_lea.hbm %s0, %s146
          %s148 = sshll.u32 %s140, 4
          %s149 = int_to_ptr.vmem [resolvable:$true] %s148
          %154 = dma.hbm_to_vmem [thread:$0]  %s147, 8192, %s149, %s137, 256, 256, 16
        $region28: #{tpu_custom_call.1} parent=23 // pred_fallthru
          _
      $region24: #{tpu_custom_call.1} parent=5 // pred_fallthru
        _
      %p155 = scmp.le.s32.totalorder 1, %s14
      %p156 = scmp.lt.s32.totalorder %s14, 5
      %p157 = pnand %p155, %p156
      %p158 = pneg %p157
      // Predicated region
      $region29: #{tpu_custom_call.1} parent=5 // pred_check
        _
      $region30: #{tpu_custom_call.1} parent=5 // pred_check_branch
        %160 = sbr.rel (%p157) target = $region32
      $region31: #{tpu_custom_call.1} parent=5 // pred_region
        %s161 = ssub.s32 %s14, 1
        %s162 = sand.u32 %s27, 1
        %s163 = scalar_lea.sflag [#allocation4], %s162
        %s164 = sand.u32 %s27, 1
        %s165 = smul.addr %s164, 512
        %s166 = scalar_lea.vmem [#allocation3], %s165
        // Predicated region
        $region33: #{tpu_custom_call.1} parent=31 // pred_check
          %p167 = pneg %p40
        $region34: #{tpu_custom_call.1} parent=31 // pred_check_branch
          %169 = sbr.rel (%p167) target = $region36
        $region35: #{tpu_custom_call.1} parent=31 // pred_region
          %170 = dma.done %s163, 8192
        $region36: #{tpu_custom_call.1} parent=31 // pred_fallthru
          _
        %s171 = sand.u32 %s27, 1
        %s172 = scalar_lea.sflag [#allocation4], %s171
        %s173 = sand.u32 %s27, 1
        %s174 = smul.addr %s173, 512
        %s175 = scalar_lea.vmem [#allocation3], %s174
        %p176 = pneg %p40
        %p177 = pneg %p37
        %p178 = pneg %p61
        %p179 = pneg %p58
        %p180 = pneg %p82
        %p181 = pneg %p79
        %p182 = pneg %p108
        %p183 = pneg %p105
        %s184 = smul.u32 32, %s19
        %p185 = scmp.lt.s32.totalorder %s184, 127
        %s186 = scalar_select %p185, %s184, 127
        %s187 = smul.addr %s186, 8
        %s188 = scalar_lea.vmem %s3, %s187
        %s189 = smul.u32 32, %s19
        %s190 = smul.u32 32, %s19
        %p191 = scmp.lt.s32.totalorder %s190, 127
        %s192 = scalar_select %p191, %s190, 127
        %s193 = smul.addr %s192, 8
        %s194 = scalar_lea.vmem %s3, %s193
        %s195 = smul.u32 32, %s19
        %v196 = vld [vmem:[%s166] sm:$0xff]
        %v197 = vld [vmem:[%s166 + $0x8] sm:$0xff]
        %v198 = vld [vmem:[%s166 + $0x10] sm:$0xff]
        %v199 = vld [vmem:[%s166 + $0x18] sm:$0xff]
        %v200 = vld [vmem:[%s166 + $0x20] sm:$0xff]
        %v201 = vld [vmem:[%s166 + $0x28] sm:$0xff]
        %v202 = vld [vmem:[%s166 + $0x30] sm:$0xff]
        %v203 = vld [vmem:[%s166 + $0x38] sm:$0xff]
        %v204 = vld [vmem:[%s166 + $0x40] sm:$0xff]
        %v205 = vld [vmem:[%s166 + $0x48] sm:$0xff]
        %v206 = vld [vmem:[%s166 + $0x50] sm:$0xff]
        %v207 = vld [vmem:[%s166 + $0x58] sm:$0xff]
        %v208 = vld [vmem:[%s166 + $0x60] sm:$0xff]
        %v209 = vld [vmem:[%s166 + $0x68] sm:$0xff]
        %v210 = vld [vmem:[%s166 + $0x70] sm:$0xff]
        %v211 = vld [vmem:[%s166 + $0x78] sm:$0xff]
        %v212 = vld [vmem:[%s166 + $0x80] sm:$0xff]
        %v213 = vld [vmem:[%s166 + $0x88] sm:$0xff]
        %v214 = vld [vmem:[%s166 + $0x90] sm:$0xff]
        %v215 = vld [vmem:[%s166 + $0x98] sm:$0xff]
        %v216 = vld [vmem:[%s166 + $0xa0] sm:$0xff]
        %v217 = vld [vmem:[%s166 + $0xa8] sm:$0xff]
        %v218 = vld [vmem:[%s166 + $0xb0] sm:$0xff]
        %v219 = vld [vmem:[%s166 + $0xb8] sm:$0xff]
        %v220 = vld [vmem:[%s166 + $0xc0] sm:$0xff]
        %v221 = vld [vmem:[%s166 + $0xc8] sm:$0xff]
        %v222 = vld [vmem:[%s166 + $0xd0] sm:$0xff]
        %v223 = vld [vmem:[%s166 + $0xd8] sm:$0xff]
        %v224 = vld [vmem:[%s166 + $0xe0] sm:$0xff]
        %v225 = vld [vmem:[%s166 + $0xe8] sm:$0xff]
        %v226 = vld [vmem:[%s166 + $0xf0] sm:$0xff]
        %v227 = vld [vmem:[%s166 + $0xf8] sm:$0xff]
        %v228 = vld [vmem:[%s166 + $0x100] sm:$0xff]
        %v229 = vld [vmem:[%s166 + $0x108] sm:$0xff]
        %v230 = vld [vmem:[%s166 + $0x110] sm:$0xff]
        %v231 = vld [vmem:[%s166 + $0x118] sm:$0xff]
        %v232 = vld [vmem:[%s166 + $0x120] sm:$0xff]
        %v233 = vld [vmem:[%s166 + $0x128] sm:$0xff]
        %v234 = vld [vmem:[%s166 + $0x130] sm:$0xff]
        %v235 = vld [vmem:[%s166 + $0x138] sm:$0xff]
        %v236 = vld [vmem:[%s166 + $0x140] sm:$0xff]
        %v237 = vld [vmem:[%s166 + $0x148] sm:$0xff]
        %v238 = vld [vmem:[%s166 + $0x150] sm:$0xff]
        %v239 = vld [vmem:[%s166 + $0x158] sm:$0xff]
        %v240 = vld [vmem:[%s166 + $0x160] sm:$0xff]
        %v241 = vld [vmem:[%s166 + $0x168] sm:$0xff]
        %v242 = vld [vmem:[%s166 + $0x170] sm:$0xff]
        %v243 = vld [vmem:[%s166 + $0x178] sm:$0xff]
        %v244 = vld [vmem:[%s166 + $0x180] sm:$0xff]
        %v245 = vld [vmem:[%s166 + $0x188] sm:$0xff]
        %v246 = vld [vmem:[%s166 + $0x190] sm:$0xff]
        %v247 = vld [vmem:[%s166 + $0x198] sm:$0xff]
        %v248 = vld [vmem:[%s166 + $0x1a0] sm:$0xff]
        %v249 = vld [vmem:[%s166 + $0x1a8] sm:$0xff]
        %v250 = vld [vmem:[%s166 + $0x1b0] sm:$0xff]
        %v251 = vld [vmem:[%s166 + $0x1b8] sm:$0xff]
        %v252 = vld [vmem:[%s166 + $0x1c0] sm:$0xff]
        %v253 = vld [vmem:[%s166 + $0x1c8] sm:$0xff]
        %v254 = vld [vmem:[%s166 + $0x1d0] sm:$0xff]
        %v255 = vld [vmem:[%s166 + $0x1d8] sm:$0xff]
        %v256 = vld [vmem:[%s166 + $0x1e0] sm:$0xff]
        %v257 = vld [vmem:[%s166 + $0x1e8] sm:$0xff]
        %v258 = vld [vmem:[%s166 + $0x1f0] sm:$0xff]
        %v259 = vld [vmem:[%s166 + $0x1f8] sm:$0xff]
        %v260 = vld [vmem:[%s1] sm:$0x3]
        %v262 = vlaneseq
        %v263 = vshrl.u32 %v262, 7
        %v264 = vsub.s32 0, %v263
        %v265 = vrot.slane %v260, %v264
        %v266 = vlaneseq
        %v267 = vshrl.u32 %v266, 7
        %v268 = vsub.s32 1, %v267
        %v269 = vrot.slane %v260, %v268
        %v272 = vmul.f32 %v196, %v265
        %v273 = vmul.f32 %v197, %v269
        %v274 = vmul.f32 %v198, %v265
        %v275 = vmul.f32 %v199, %v269
        %v276 = vmul.f32 %v200, %v265
        %v277 = vmul.f32 %v201, %v269
        %v278 = vmul.f32 %v202, %v265
        %v279 = vmul.f32 %v203, %v269
        %v280 = vmul.f32 %v204, %v265
        %v281 = vmul.f32 %v205, %v269
        %v282 = vmul.f32 %v206, %v265
        %v283 = vmul.f32 %v207, %v269
        %v284 = vmul.f32 %v208, %v265
        %v285 = vmul.f32 %v209, %v269
        %v286 = vmul.f32 %v210, %v265
        %v287 = vmul.f32 %v211, %v269
        %v288 = vmul.f32 %v212, %v265
        %v289 = vmul.f32 %v213, %v269
        %v290 = vmul.f32 %v214, %v265
        %v291 = vmul.f32 %v215, %v269
        %v292 = vmul.f32 %v216, %v265
        %v293 = vmul.f32 %v217, %v269
        %v294 = vmul.f32 %v218, %v265
        %v295 = vmul.f32 %v219, %v269
        %v296 = vmul.f32 %v220, %v265
        %v297 = vmul.f32 %v221, %v269
        %v298 = vmul.f32 %v222, %v265
        %v299 = vmul.f32 %v223, %v269
        %v300 = vmul.f32 %v224, %v265
        %v301 = vmul.f32 %v225, %v269
        %v302 = vmul.f32 %v226, %v265
        %v303 = vmul.f32 %v227, %v269
        %v304 = vmul.f32 %v228, %v265
        %v305 = vmul.f32 %v229, %v269
        %v306 = vmul.f32 %v230, %v265
        %v307 = vmul.f32 %v231, %v269
        %v308 = vmul.f32 %v232, %v265
        %v309 = vmul.f32 %v233, %v269
        %v310 = vmul.f32 %v234, %v265
        %v311 = vmul.f32 %v235, %v269
        %v312 = vmul.f32 %v236, %v265
        %v313 = vmul.f32 %v237, %v269
        %v314 = vmul.f32 %v238, %v265
        %v315 = vmul.f32 %v239, %v269
        %v316 = vmul.f32 %v240, %v265
        %v317 = vmul.f32 %v241, %v269
        %v318 = vmul.f32 %v242, %v265
        %v319 = vmul.f32 %v243, %v269
        %v320 = vmul.f32 %v244, %v265
        %v321 = vmul.f32 %v245, %v269
        %v322 = vmul.f32 %v246, %v265
        %v323 = vmul.f32 %v247, %v269
        %v324 = vmul.f32 %v248, %v265
        %v325 = vmul.f32 %v249, %v269
        %v326 = vmul.f32 %v250, %v265
        %v327 = vmul.f32 %v251, %v269
        %v328 = vmul.f32 %v252, %v265
        %v329 = vmul.f32 %v253, %v269
        %v330 = vmul.f32 %v254, %v265
        %v331 = vmul.f32 %v255, %v269
        %v332 = vmul.f32 %v256, %v265
        %v333 = vmul.f32 %v257, %v269
        %v334 = vmul.f32 %v258, %v265
        %v335 = vmul.f32 %v259, %v269
        %v336 = vadd.f32 %v272, %v273
        %337 = vadd.xlane.f32.xlu0 %v336
        %v338 = vpop.xlane.xlu0 %337
        %v339 = vadd.f32 %v274, %v275
        %340 = vadd.xlane.f32.xlu0 %v339
        %v341 = vpop.xlane.xlu0 %340
        %v342 = vadd.f32 %v276, %v277
        %343 = vadd.xlane.f32.xlu0 %v342
        %v344 = vpop.xlane.xlu0 %343
        %v345 = vadd.f32 %v278, %v279
        %346 = vadd.xlane.f32.xlu0 %v345
        %v347 = vpop.xlane.xlu0 %346
        %v348 = vadd.f32 %v280, %v281
        %349 = vadd.xlane.f32.xlu0 %v348
        %v350 = vpop.xlane.xlu0 %349
        %v351 = vadd.f32 %v282, %v283
        %352 = vadd.xlane.f32.xlu0 %v351
        %v353 = vpop.xlane.xlu0 %352
        %v354 = vadd.f32 %v284, %v285
        %355 = vadd.xlane.f32.xlu0 %v354
        %v356 = vpop.xlane.xlu0 %355
        %v357 = vadd.f32 %v286, %v287
        %358 = vadd.xlane.f32.xlu0 %v357
        %v359 = vpop.xlane.xlu0 %358
        %v360 = vadd.f32 %v288, %v289
        %361 = vadd.xlane.f32.xlu0 %v360
        %v362 = vpop.xlane.xlu0 %361
        %v363 = vadd.f32 %v290, %v291
        %364 = vadd.xlane.f32.xlu0 %v363
        %v365 = vpop.xlane.xlu0 %364
        %v366 = vadd.f32 %v292, %v293
        %367 = vadd.xlane.f32.xlu0 %v366
        %v368 = vpop.xlane.xlu0 %367
        %v369 = vadd.f32 %v294, %v295
        %370 = vadd.xlane.f32.xlu0 %v369
        %v371 = vpop.xlane.xlu0 %370
        %v372 = vadd.f32 %v296, %v297
        %373 = vadd.xlane.f32.xlu0 %v372
        %v374 = vpop.xlane.xlu0 %373
        %v375 = vadd.f32 %v298, %v299
        %376 = vadd.xlane.f32.xlu0 %v375
        %v377 = vpop.xlane.xlu0 %376
        %v378 = vadd.f32 %v300, %v301
        %379 = vadd.xlane.f32.xlu0 %v378
        %v380 = vpop.xlane.xlu0 %379
        %v381 = vadd.f32 %v302, %v303
        %382 = vadd.xlane.f32.xlu0 %v381
        %v383 = vpop.xlane.xlu0 %382
        %v384 = vadd.f32 %v304, %v305
        %385 = vadd.xlane.f32.xlu0 %v384
        %v386 = vpop.xlane.xlu0 %385
        %v387 = vadd.f32 %v306, %v307
        %388 = vadd.xlane.f32.xlu0 %v387
        %v389 = vpop.xlane.xlu0 %388
        %v390 = vadd.f32 %v308, %v309
        %391 = vadd.xlane.f32.xlu0 %v390
        %v392 = vpop.xlane.xlu0 %391
        %v393 = vadd.f32 %v310, %v311
        %394 = vadd.xlane.f32.xlu0 %v393
        %v395 = vpop.xlane.xlu0 %394
        %v396 = vadd.f32 %v312, %v313
        %397 = vadd.xlane.f32.xlu0 %v396
        %v398 = vpop.xlane.xlu0 %397
        %v399 = vadd.f32 %v314, %v315
        %400 = vadd.xlane.f32.xlu0 %v399
        %v401 = vpop.xlane.xlu0 %400
        %v402 = vadd.f32 %v316, %v317
        %403 = vadd.xlane.f32.xlu0 %v402
        %v404 = vpop.xlane.xlu0 %403
        %v405 = vadd.f32 %v318, %v319
        %406 = vadd.xlane.f32.xlu0 %v405
        %v407 = vpop.xlane.xlu0 %406
        %v408 = vadd.f32 %v320, %v321
        %409 = vadd.xlane.f32.xlu0 %v408
        %v410 = vpop.xlane.xlu0 %409
        %v411 = vadd.f32 %v322, %v323
        %412 = vadd.xlane.f32.xlu0 %v411
        %v413 = vpop.xlane.xlu0 %412
        %v414 = vadd.f32 %v324, %v325
        %415 = vadd.xlane.f32.xlu0 %v414
        %v416 = vpop.xlane.xlu0 %415
        %v417 = vadd.f32 %v326, %v327
        %418 = vadd.xlane.f32.xlu0 %v417
        %v419 = vpop.xlane.xlu0 %418
        %v420 = vadd.f32 %v328, %v329
        %421 = vadd.xlane.f32.xlu0 %v420
        %v422 = vpop.xlane.xlu0 %421
        %v423 = vadd.f32 %v330, %v331
        %424 = vadd.xlane.f32.xlu0 %v423
        %v425 = vpop.xlane.xlu0 %424
        %v426 = vadd.f32 %v332, %v333
        %427 = vadd.xlane.f32.xlu0 %v426
        %v428 = vpop.xlane.xlu0 %427
        %v429 = vadd.f32 %v334, %v335
        %430 = vadd.xlane.f32.xlu0 %v429
        %v431 = vpop.xlane.xlu0 %430
        %v432 = vld [vmem:[#allocation2] sm:$0x1]
        %v434 = vlaneseq
        %v435 = vshrl.u32 %v434, 7
        %v436 = vsub.s32 0, %v435
        %v437 = vrot.slane %v432, %v436
        %v439 = vadd.f32 %v338, %v437
        %v440 = vadd.f32 %v341, %v437
        %v441 = vadd.f32 %v344, %v437
        %v442 = vadd.f32 %v347, %v437
        %v443 = vadd.f32 %v350, %v437
        %v444 = vadd.f32 %v353, %v437
        %v445 = vadd.f32 %v356, %v437
        %v446 = vadd.f32 %v359, %v437
        %v447 = vadd.f32 %v362, %v437
        %v448 = vadd.f32 %v365, %v437
        %v449 = vadd.f32 %v368, %v437
        %v450 = vadd.f32 %v371, %v437
        %v451 = vadd.f32 %v374, %v437
        %v452 = vadd.f32 %v377, %v437
        %v453 = vadd.f32 %v380, %v437
        %v454 = vadd.f32 %v383, %v437
        %v455 = vadd.f32 %v386, %v437
        %v456 = vadd.f32 %v389, %v437
        %v457 = vadd.f32 %v392, %v437
        %v458 = vadd.f32 %v395, %v437
        %v459 = vadd.f32 %v398, %v437
        %v460 = vadd.f32 %v401, %v437
        %v461 = vadd.f32 %v404, %v437
        %v462 = vadd.f32 %v407, %v437
        %v463 = vadd.f32 %v410, %v437
        %v464 = vadd.f32 %v413, %v437
        %v465 = vadd.f32 %v416, %v437
        %v466 = vadd.f32 %v419, %v437
        %v467 = vadd.f32 %v422, %v437
        %v468 = vadd.f32 %v425, %v437
        %v469 = vadd.f32 %v428, %v437
        %v470 = vadd.f32 %v431, %v437
        %vm471 = vcmask 7168
        %472 = vst.msk [vmem:[%s194] sm:$0xff] %vm471, %v439
        %473 = vst.msk [vmem:[%s194 + $0x8] sm:$0xff] %vm471, %v440
        %474 = vst.msk [vmem:[%s194 + $0x10] sm:$0xff] %vm471, %v441
        %475 = vst.msk [vmem:[%s194 + $0x18] sm:$0xff] %vm471, %v442
        %476 = vst.msk [vmem:[%s194 + $0x20] sm:$0xff] %vm471, %v443
        %477 = vst.msk [vmem:[%s194 + $0x28] sm:$0xff] %vm471, %v444
        %478 = vst.msk [vmem:[%s194 + $0x30] sm:$0xff] %vm471, %v445
        %479 = vst.msk [vmem:[%s194 + $0x38] sm:$0xff] %vm471, %v446
        %480 = vst.msk [vmem:[%s194 + $0x40] sm:$0xff] %vm471, %v447
        %481 = vst.msk [vmem:[%s194 + $0x48] sm:$0xff] %vm471, %v448
        %482 = vst.msk [vmem:[%s194 + $0x50] sm:$0xff] %vm471, %v449
        %483 = vst.msk [vmem:[%s194 + $0x58] sm:$0xff] %vm471, %v450
        %484 = vst.msk [vmem:[%s194 + $0x60] sm:$0xff] %vm471, %v451
        %485 = vst.msk [vmem:[%s194 + $0x68] sm:$0xff] %vm471, %v452
        %486 = vst.msk [vmem:[%s194 + $0x70] sm:$0xff] %vm471, %v453
        %487 = vst.msk [vmem:[%s194 + $0x78] sm:$0xff] %vm471, %v454
        %488 = vst.msk [vmem:[%s194 + $0x80] sm:$0xff] %vm471, %v455
        %489 = vst.msk [vmem:[%s194 + $0x88] sm:$0xff] %vm471, %v456
        %490 = vst.msk [vmem:[%s194 + $0x90] sm:$0xff] %vm471, %v457
        %491 = vst.msk [vmem:[%s194 + $0x98] sm:$0xff] %vm471, %v458
        %492 = vst.msk [vmem:[%s194 + $0xa0] sm:$0xff] %vm471, %v459
        %493 = vst.msk [vmem:[%s194 + $0xa8] sm:$0xff] %vm471, %v460
        %494 = vst.msk [vmem:[%s194 + $0xb0] sm:$0xff] %vm471, %v461
        %495 = vst.msk [vmem:[%s194 + $0xb8] sm:$0xff] %vm471, %v462
        %496 = vst.msk [vmem:[%s194 + $0xc0] sm:$0xff] %vm471, %v463
        %497 = vst.msk [vmem:[%s194 + $0xc8] sm:$0xff] %vm471, %v464
        %498 = vst.msk [vmem:[%s194 + $0xd0] sm:$0xff] %vm471, %v465
        %499 = vst.msk [vmem:[%s194 + $0xd8] sm:$0xff] %vm471, %v466
        %500 = vst.msk [vmem:[%s194 + $0xe0] sm:$0xff] %vm471, %v467
        %501 = vst.msk [vmem:[%s194 + $0xe8] sm:$0xff] %vm471, %v468
        %502 = vst.msk [vmem:[%s194 + $0xf0] sm:$0xff] %vm471, %v469
        %503 = vst.msk [vmem:[%s194 + $0xf8] sm:$0xff] %vm471, %v470
        %s504 = smul.u32 32, %s19
        %p505 = scmp.lt.s32.totalorder %s504, 127
        %s506 = scalar_select %p505, %s504, 127
        %s507 = smul.addr %s506, 8
        %s508 = scalar_lea.vmem %s3, %s507
        // Predicated region
        $region37: #{tpu_custom_call.1} parent=31 // pred_check
          %p509 = pneg %p105
        $region38: #{tpu_custom_call.1} parent=31 // pred_check_branch
          %511 = sbr.rel (%p509) target = $region40
        $region39: #{tpu_custom_call.1} parent=31 // pred_region
          %s512 = smul.u32 32, %s19
        $region40: #{tpu_custom_call.1} parent=31 // pred_fallthru
          _
      $region32: #{tpu_custom_call.1} parent=5 // pred_fallthru
        _
      %p513 = scmp.le.s32.totalorder 2, %s14
      // Predicated region
      $region41: #{tpu_custom_call.1} parent=5 // pred_check
        %p514 = pneg %p513
      $region42: #{tpu_custom_call.1} parent=5 // pred_check_branch
        %516 = sbr.rel (%p514) target = $region44
      $region43: #{tpu_custom_call.1} parent=5 // pred_region
        %s517 = ssub.s32 %s14, 2
        // Predicated region
        $region45: #{tpu_custom_call.1} parent=43 // pred_check
          %p518 = pneg %p111
        $region46: #{tpu_custom_call.1} parent=43 // pred_check_branch
          %520 = sbr.rel (%p518) target = $region48
        $region47: #{tpu_custom_call.1} parent=43 // pred_region
          %s521 = smul.u32 32, %s20
          %p522 = scmp.lt.s32.totalorder %s521, 127
          %s523 = scalar_select %p522, %s521, 127
          %s524 = smul.addr %s523, 8
          %s525 = scalar_lea.vmem %s3, %s524
        $region48: #{tpu_custom_call.1} parent=43 // pred_fallthru
          _
      $region44: #{tpu_custom_call.1} parent=5 // pred_fallthru
        _
    $region6: #{tpu_custom_call.1} parent=1 // loop_footer
      %s18 = sadd.s32 1, %s14
    $region7: #{tpu_custom_call.1} parent=1 // loop_footer_branch
      %13 = sbr.rel target = $region3
    $region8: #{tpu_custom_call.1} parent=1 // loop_exit
      _
    %526 = vsyncpa [#allocation4], 1
    %s527 = scalar_lea.sflag [#allocation4], 1
    %528 = vsyncpa %s527, 1

</llo_original>
